<compile_context>
chip_gen: v7x
topology: tpu7x:2x2x1
jax: 0.10.0
libtpu: 0.0.40
codegen_flags: <defaults>
</compile_context>

<pallas_src>
import math

import jax
import jax.numpy as jnp
from jax.experimental import pallas as pl
from jax.experimental.pallas import tpu as pltpu


def _round_up(n, m):
    return ((n + m - 1) // m) * m


def _band_matrix(seq_len, kernel_size, stride=1):
    """Dense (W_in, W_out) matrix implementing replicate-pad + AvgPool on the seq dim.

    out[:, j] = mean_k x[:, clip(j*stride - pad + k, 0, W-1)], k in [0, K)
    == replicate-pad by (K-1)//2 then AvgPool(kernel=K, stride, padding=0), i.e. the
    exact PyTorch moving_avg.
    """
    pad = (kernel_size - 1) // 2
    w_out = (seq_len + 2 * pad - kernel_size) // stride + 1
    taps = jnp.arange(kernel_size)                                      # (K,)
    out_start = jnp.arange(w_out) * stride - pad                        # (W_out,)
    src = jnp.clip(out_start[:, None] + taps[None, :], 0, seq_len - 1)  # (W_out, K)
    in_idx = jnp.arange(seq_len)                                        # (W_in,)
    counts = (src[None, :, :] == in_idx[:, None, None]).sum(-1)         # (W_in, W_out)
    return counts.astype(jnp.float32) / float(kernel_size)


def _block_diag(band, g):
    """g copies of (W, W) `band` on the diagonal of a (g*W, g*W) matrix."""
    if g == 1:
        return band
    w = band.shape[0]
    eye = jnp.eye(g, dtype=band.dtype)
    return (eye[:, None, :, None] * band[None, :, None, :]).reshape(g * w, g * w)


def _pick_lane_pack(num_rows, seq_len, max_packed_width=1024):
    """How many flattened rows to fold into the lane axis so vreg lanes are filled."""
    if seq_len >= 128:
        return 1
    g = 128 // math.gcd(seq_len, 128)          # smallest g with (g*W) % 128 == 0
    if g * seq_len <= max_packed_width and num_rows % g == 0:
        return g
    # Fallback: largest g <= floor(128/W) that divides num_rows (still improves fill).
    g = max(1, 128 // seq_len)
    while g > 1 and num_rows % g != 0:
        g -= 1
    return g


def _pick_block_rows(num_rows, row_width, itemsize, target_bytes=4 << 20, min_blocks=4):
    """Byte-targeted block rows (multiple of 8), capped so the grid has >= min_blocks."""
    rows = target_bytes // max(1, row_width * itemsize)
    rows = max(8, (rows // 8) * 8)
    rows = min(rows, _round_up(num_rows, 8))
    cap = max(8, _round_up(-(-num_rows // min_blocks), 8))
    return max(8, min(rows, cap))


def _series_decomp_kernel(x_ref, band_ref, res_ref, mean_ref):
    # x_ref:    (bm, gW)  rows = (packs of) flattened (batch, channel, height)
    # band_ref: (gW, gW)  block-diagonal replicate-pad moving-average (MXU, resident)
    x = x_ref[...]
    mean = jnp.dot(x, band_ref[...], preferred_element_type=jnp.float32)
    mean_ref[...] = mean.astype(mean_ref.dtype)
    res_ref[...] = (x.astype(jnp.float32) - mean).astype(res_ref.dtype)


def _moving_mean_kernel(x_ref, band_ref, mean_ref):
    mean_ref[...] = jnp.dot(
        x_ref[...], band_ref[...], preferred_element_type=jnp.float32
    ).astype(mean_ref.dtype)


def _decompose(x, kernel_size, with_residual):
    assert x.ndim == 4, "expected NCHW input"
    assert kernel_size % 2 == 1, "series_decomp needs odd kernel_size for same-length output"
    B, C, H, W = x.shape
    M = B * C * H

    g = _pick_lane_pack(M, W)
    gw = g * W
    mg = M // g
    x2 = x.reshape(mg, gw)                          # pure row-major reshape

    band_dtype = jnp.bfloat16 if x.dtype == jnp.bfloat16 else jnp.float32
    band = _block_diag(_band_matrix(W, kernel_size, 1), g).astype(band_dtype)

    itemsize = jnp.dtype(x.dtype).itemsize
    bm = _pick_block_rows(mg, gw, itemsize)
    grid = (pl.cdiv(mg, bm),)

    # Explicit VMEM budget: double-buffered input + output streams + resident band.
    n_streams = 3 if with_residual else 2
    block_bytes = bm * gw * itemsize
    band_bytes = gw * gw * jnp.dtype(band_dtype).itemsize
    vmem_est = 2 * n_streams * block_bytes + 2 * band_bytes + (2 << 20)
    vmem_limit = int(min(64 << 20, max(32 << 20, vmem_est)))

    row_spec = pl.BlockSpec((bm, gw), lambda i: (i, 0))
    band_spec = pl.BlockSpec((gw, gw), lambda i: (0, 0))   # constant index -> resident
    params = pltpu.CompilerParams(
        dimension_semantics=("parallel",),                 # splits across v7x's 2 TCs
        vmem_limit_bytes=vmem_limit,
    )

    if with_residual:
        res2, mean2 = pl.pallas_call(
            _series_decomp_kernel,
            out_shape=(
                jax.ShapeDtypeStruct((mg, gw), x.dtype),
                jax.ShapeDtypeStruct((mg, gw), x.dtype),
            ),
            grid=grid,
            in_specs=[row_spec, band_spec],
            out_specs=(row_spec, row_spec),
            compiler_params=params,
        )(x2, band)
        return res2.reshape(B, C, H, W), mean2.reshape(B, C, H, W)

    mean2 = pl.pallas_call(
        _moving_mean_kernel,
        out_shape=jax.ShapeDtypeStruct((mg, gw), x.dtype),
        grid=grid,
        in_specs=[row_spec, band_spec],
        out_specs=row_spec,
        compiler_params=params,
    )(x2, band)
    return mean2.reshape(B, C, H, W)


def series_decomp(x, kernel_size):
    """Equivalent of series_decomp(kernel_size).forward(x) for NCHW x → (res, moving_mean)."""
    return _decompose(x, kernel_size, with_residual=True)


def moving_avg(x, kernel_size):
    """moving_avg(kernel_size, stride=1).forward(x) — mean branch only (single output)."""
    return _decompose(x, kernel_size, with_residual=False)


def _reference(x, kernel_size):
    # Pure-JAX reference matching the PyTorch series_decomp semantics (stride=1).
    pad = (kernel_size - 1) // 2
    xp = jnp.concatenate(
        [jnp.repeat(x[..., 0:1], pad, axis=-1), x, jnp.repeat(x[..., -1:], pad, axis=-1)],
        axis=-1,
    )
    summed = jax.lax.reduce_window(
        xp, 0.0, jax.lax.add,
        window_dimensions=(1, 1, 1, kernel_size),
        window_strides=(1, 1, 1, 1),
        padding="VALID",
    )
    mean = summed / kernel_size
    return x - mean, mean


if __name__ == "__main__":
    key = jax.random.PRNGKey(0)

    # Main test: small-W case that exercises the lane-packing path (g = 8).
    B, C, H, W = 2, 4, 16, 16
    x = jax.random.normal(key, (B, C, H, W), dtype=jnp.float32)

    for ks in (5, 25):
        res, mean = series_decomp(x, ks)
        res = jax.block_until_ready(res)
        mean = jax.block_until_ready(mean)
        ref_res, ref_mean = _reference(x, ks)
        assert res.shape == ref_res.shape and mean.shape == ref_mean.shape
        assert jnp.allclose(mean, ref_mean, atol=1e-5, rtol=1e-5), f"mean mismatch K={ks}"
        assert jnp.allclose(res, ref_res, atol=1e-5, rtol=1e-5), f"res mismatch K={ks}"

    # Single-output moving_avg path.
    mean_only = jax.block_until_ready(moving_avg(x, 5))
    assert jnp.allclose(mean_only, _reference(x, 5)[1], atol=1e-5, rtol=1e-5)

    # Unpacked path (W >= 128, g = 1).
    x2 = jax.random.normal(jax.random.PRNGKey(1), (1, 2, 4, 128), dtype=jnp.float32)
    res2, mean2 = series_decomp(x2, 7)
    jax.block_until_ready(mean2)
    ref_res2, ref_mean2 = _reference(x2, 7)
    assert jnp.allclose(mean2, ref_mean2, atol=1e-5, rtol=1e-5)
    assert jnp.allclose(res2, ref_res2, atol=1e-5, rtol=1e-5)

    print("KERNEL_OK")
</pallas_src>

<mosaic_0001>
module attributes {stable_mosaic.version = 11 : i64} {
  func.func @_series_decomp_kernel(%arg0: i32, %arg1: memref<8x128xf32, #tpu.memory_space<vmem>>, %arg2: memref<128x128xf32, #tpu.memory_space<vmem>>, %arg3: memref<8x128xf32, #tpu.memory_space<vmem>>, %arg4: memref<8x128xf32, #tpu.memory_space<vmem>>) attributes {dimension_semantics = [#tpu.dimension_semantics<parallel>], iteration_bounds = array<i64: 2>, scalar_prefetch = 0 : i64, scratch_operands = 0 : i64, tpu.core_type = #tpu.core_type<tc>, window_params = [{transform_indices = @transform_0, window_bounds = array<i64: 8, 128>}, {pipeline_mode = #tpu.pipeline_mode<synchronous>, transform_indices = @transform_1, window_bounds = array<i64: 128, 128>}, {transform_indices = @transform_2, window_bounds = array<i64: 8, 128>}, {transform_indices = @transform_3, window_bounds = array<i64: 8, 128>}]} {
    %c0 = arith.constant 0 : index
    %c0_0 = arith.constant 0 : index
    %0 = vector.load %arg1[%c0, %c0_0] : memref<8x128xf32, #tpu.memory_space<vmem>>, vector<8x128xf32>
    %c0_1 = arith.constant 0 : index
    %c0_2 = arith.constant 0 : index
    %1 = vector.load %arg2[%c0_1, %c0_2] : memref<128x128xf32, #tpu.memory_space<vmem>>, vector<128x128xf32>
    %cst = arith.constant dense<0.000000e+00> : vector<8x128xf32>
    %2 = tpu.matmul %0, %1, %cst {dimension_numbers = #tpu.dot_dimension_numbers<[1], [0], [0], [1], [0, 0, 1, 1], [], []>} : vector<8x128xf32>, vector<128x128xf32>, vector<8x128xf32> -> vector<8x128xf32>
    %c0_3 = arith.constant 0 : index
    %c0_4 = arith.constant 0 : index
    %3 = vector.load %arg4[%c0_3, %c0_4] : memref<8x128xf32, #tpu.memory_space<vmem>>, vector<8x128xf32>
    tpu.vector_store %arg4[%c0_3, %c0_4], %2 {strides = array<i32>} : memref<8x128xf32, #tpu.memory_space<vmem>>, vector<8x128xf32>,
    %4 = arith.subf %0, %2 : vector<8x128xf32>
    %c0_5 = arith.constant 0 : index
    %c0_6 = arith.constant 0 : index
    %5 = vector.load %arg3[%c0_5, %c0_6] : memref<8x128xf32, #tpu.memory_space<vmem>>, vector<8x128xf32>
    tpu.vector_store %arg3[%c0_5, %c0_6], %4 {strides = array<i32>} : memref<8x128xf32, #tpu.memory_space<vmem>>, vector<8x128xf32>,
    return
  }
  func.func @transform_0(%arg0: i32) -> (i32, i32) {
    %c0_i32 = arith.constant 0 : i32
    %c0_i32_0 = arith.constant 0 : i32
    return %arg0, %c0_i32 : i32, i32
  }
  func.func @transform_1(%arg0: i32) -> (i32, i32) {
    %c0_i32 = arith.constant 0 : i32
    %c0_i32_0 = arith.constant 0 : i32
    %c0_i32_1 = arith.constant 0 : i32
    return %c0_i32, %c0_i32_0 : i32, i32
  }
  func.func @transform_2(%arg0: i32) -> (i32, i32) {
    %c0_i32 = arith.constant 0 : i32
    %c0_i32_0 = arith.constant 0 : i32
    return %arg0, %c0_i32 : i32, i32
  }
  func.func @transform_3(%arg0: i32) -> (i32, i32) {
    %c0_i32 = arith.constant 0 : i32
    %c0_i32_0 = arith.constant 0 : i32
    return %arg0, %c0_i32 : i32, i32
  }
}

</mosaic_0001>

<llo_original>
// kernel: tpu_custom_call.1
$region0: #{tpu_custom_call.1}
  #allocation0 [shape = 'u32[]', space=smem, size = 0x4, offset = 0x4, fixed_abs, tag = 'smem constant byte address 0x4 - core index']
  #allocation1 [shape = 'u32[144,128]{1,0:T(1,128)}', space=vmem, size = 0x12000, scoped, tag = 'internal scratch']
  %s0 = inlined_call_operand.hbm [shape: f32[16,128], index: 0, kind: input, shape index: {}]
  %s1 = inlined_call_operand.hbm [shape: f32[128,128], index: 1, kind: input, shape index: {}]
  %s2 = inlined_call_operand.hbm [shape: f32[16,128], index: 2, kind: output, shape index: {0}]
  %s3 = inlined_call_operand.hbm [shape: f32[16,128], index: 3, kind: output, shape index: {1}]
  %4 = xla_tuple %s2, %s3
  %s5 = sld [smem:[#allocation0]]
  $region57: #{tpu_custom_call.1} parent=0
    _
  %s7 = ssub.s32 1, %s5
  %s8 = scalar_select 0, %s7, %s5
  $region1: #{tpu_custom_call.1} parent=0
    #allocation2 [shape = 'u8[8192]{0}', space=vmem, size = 0x2000, scoped, tag = 'input window, operand 0']
    #allocation3 [shape = 's32[2]{0}', space=sflag, size = 0x8, scoped, tag = 'scoped memory for tpu_custom_call.1']
    #allocation4 [shape = 's32[2]{0}', space=sflag, size = 0x8, scoped, tag = 'scoped memory for tpu_custom_call.1']
    #allocation5 [shape = 'u8[65536]{0}', space=vmem, size = 0x10000, scoped, tag = 'input window, operand 1, single buffered']
    #allocation6 [shape = 's32[1]{0}', space=sflag, size = 0x4, scoped, tag = 'scoped memory for tpu_custom_call.1']
    #allocation7 [shape = 'u8[8192]{0}', space=vmem, size = 0x2000, scoped, tag = 'output window, operand 0']
    #allocation8 [shape = 'u8[8192]{0}', space=vmem, size = 0x2000, scoped, tag = 'output window, operand 1']
    #allocation9 [shape = 's32[2]{0}', space=sflag, size = 0x8, scoped, tag = 'scoped memory for tpu_custom_call.1']
    %9 = vsyncpa [#allocation3], 0
    %s10 = scalar_lea.sflag [#allocation3], 1
    %11 = vsyncpa %s10, 0
    %12 = vsyncpa [#allocation6], 0
    %13 = vsyncpa [#allocation4], 0
    %s14 = scalar_lea.sflag [#allocation4], 1
    %15 = vsyncpa %s14, 0
    %16 = vsyncpa [#allocation9], 0
    %s17 = scalar_lea.sflag [#allocation9], 1
    %18 = vsyncpa %s17, 0
    loop: start=0, step=1, limit=4
    $region2: #{tpu_custom_call.1} parent=1 // loop_pre_header
      _
    $region3: #{tpu_custom_call.1} parent=1 // loop_header
      %s20 = sphi 0, %s24
      %p21 = scmp.ge.s32.totalorder %s20, 4
      %s30 = sphi 0, %s32
      %s33 = sphi 0, %s30
      %s34 = sphi 0, %s33
      %s50 = sphi 0, %s34
      %s54 = sphi 0, %s54
      %s56 = sphi 0, %s54
      %s57 = sphi 0, %s56
      %s71 = sphi 0, %s57
      %s77 = sphi 0, %s79
      %s80 = sphi 0, %s77
      %s81 = sphi 0, %s80
      %s97 = sphi 0, %s81
      %s103 = sphi 0, %s105
      %s106 = sphi 0, %s103
      %s107 = sphi 0, %s106
      %s123 = sphi 0, %s107
    $region4: #{tpu_custom_call.1} parent=1 // loop_header_branch
      %23 = sbr.rel (%p21) target = $region8
    $region5: #{tpu_custom_call.1} parent=1 // loop_body
      %s25 = ssub.s32 %s20, 1
      %s26 = ssub.s32 %s20, 2
      %s27 = sadd.s32 %s20, 1
      %s28 = ssub.s32 %s20, %s27
      %p29 = scmp.eq.s32.totalorder %s28, 0
      %s31 = sadd.s32 %s30, 1
      %s32 = scalar_select %p29, %s30, %s31
      %p35 = pneg %p29
      %p36 = scmp.eq.s32.totalorder %s20, 1
      %p37 = por %p35, %p36
      %p38 = scmp.ne.s32.totalorder %s30, %s33
      %p39 = scmp.eq.s32.totalorder %s20, 0
      %p40 = por %p38, %p39
      %p41 = scmp.ne.s32.totalorder %s30, %s33
      %p42 = scmp.eq.s32.totalorder %s25, 1
      %p43 = por %p41, %p42
      %p44 = scmp.ne.s32.totalorder %s33, %s34
      %p45 = scmp.eq.s32.totalorder %s25, 0
      %p46 = por %p44, %p45
      %p47 = scmp.ne.s32.totalorder %s33, %s34
      %p48 = scmp.eq.s32.totalorder %s26, 1
      %p49 = por %p47, %p48
      %p51 = scmp.ne.s32.totalorder %s34, %s50
      %p52 = scmp.eq.s32.totalorder %s26, 0
      %p53 = por %p51, %p52
      %s55 = sadd.s32 %s54, 1
      %p58 = scmp.eq.s32.totalorder %s20, 1
      %p59 = scmp.ne.s32.totalorder %s54, %s56
      %p60 = scmp.eq.s32.totalorder %s20, 0
      %p61 = por %p59, %p60
      %p62 = scmp.ne.s32.totalorder %s54, %s56
      %p63 = scmp.eq.s32.totalorder %s25, 1
      %p64 = por %p62, %p63
      %p65 = scmp.ne.s32.totalorder %s56, %s57
      %p66 = scmp.eq.s32.totalorder %s25, 0
      %p67 = por %p65, %p66
      %p68 = scmp.ne.s32.totalorder %s56, %s57
      %p69 = scmp.eq.s32.totalorder %s26, 1
      %p70 = por %p68, %p69
      %p72 = scmp.ne.s32.totalorder %s57, %s71
      %p73 = scmp.eq.s32.totalorder %s26, 0
      %p74 = por %p72, %p73
      %s75 = ssub.s32 %s20, %s27
      %p76 = scmp.eq.s32.totalorder %s75, 0
      %s78 = sadd.s32 %s77, 1
      %s79 = scalar_select %p76, %s77, %s78
      %p82 = pneg %p76
      %p83 = scmp.eq.s32.totalorder %s20, 1
      %p84 = por %p82, %p83
      %p85 = scmp.ne.s32.totalorder %s77, %s80
      %p86 = scmp.eq.s32.totalorder %s20, 0
      %p87 = por %p85, %p86
      %p88 = scmp.ne.s32.totalorder %s77, %s80
      %p89 = scmp.eq.s32.totalorder %s25, 1
      %p90 = por %p88, %p89
      %p91 = scmp.ne.s32.totalorder %s80, %s81
      %p92 = scmp.eq.s32.totalorder %s25, 0
      %p93 = por %p91, %p92
      %p94 = scmp.ne.s32.totalorder %s80, %s81
      %p95 = scmp.eq.s32.totalorder %s26, 1
      %p96 = por %p94, %p95
      %p98 = scmp.ne.s32.totalorder %s81, %s97
      %p99 = scmp.eq.s32.totalorder %s26, 0
      %p100 = por %p98, %p99
      %s101 = ssub.s32 %s20, %s27
      %p102 = scmp.eq.s32.totalorder %s101, 0
      %s104 = sadd.s32 %s103, 1
      %s105 = scalar_select %p102, %s103, %s104
      %p108 = pneg %p102
      %p109 = scmp.eq.s32.totalorder %s20, 1
      %p110 = por %p108, %p109
      %p111 = scmp.ne.s32.totalorder %s103, %s106
      %p112 = scmp.eq.s32.totalorder %s20, 0
      %p113 = por %p111, %p112
      %p114 = scmp.ne.s32.totalorder %s103, %s106
      %p115 = scmp.eq.s32.totalorder %s25, 1
      %p116 = por %p114, %p115
      %p117 = scmp.ne.s32.totalorder %s106, %s107
      %p118 = scmp.eq.s32.totalorder %s25, 0
      %p119 = por %p117, %p118
      %p120 = scmp.ne.s32.totalorder %s106, %s107
      %p121 = scmp.eq.s32.totalorder %s26, 1
      %p122 = por %p120, %p121
      %p124 = scmp.ne.s32.totalorder %s107, %s123
      %p125 = scmp.eq.s32.totalorder %s26, 0
      %p126 = por %p124, %p125
      %p127 = scmp.le.s32.totalorder 1, %s20
      %p128 = scmp.lt.s32.totalorder %s20, 3
      %p129 = pnand %p127, %p128
      %p130 = pneg %p129
      // Predicated region
      $region9: #{tpu_custom_call.1} parent=5 // pred_check
        _
      $region10: #{tpu_custom_call.1} parent=5 // pred_check_branch
        %132 = sbr.rel (%p129) target = $region12
      $region11: #{tpu_custom_call.1} parent=5 // pred_region
        %s133 = ssub.s32 %s20, 1
        // Predicated region
        $region13: #{tpu_custom_call.1} parent=11 // pred_check
          %p134 = pneg %p67
        $region14: #{tpu_custom_call.1} parent=11 // pred_check_branch
          %136 = sbr.rel (%p134) target = $region16
        $region15: #{tpu_custom_call.1} parent=11 // pred_region
          %s138 = ssub.s32 2048, 2048
          %139 = vsyncadd [#allocation6], %s138
          %s140 = sshll.u32 [#allocation5], 4
          %s141 = int_to_ptr.vmem [resolvable:$true] %s140
          %146 = dma.hbm_to_vmem [thread:$0]  %s1, 2048, %s141, [#allocation6], 128, 128, 8
        $region16: #{tpu_custom_call.1} parent=11 // pred_fallthru
          _
      $region12: #{tpu_custom_call.1} parent=5 // pred_fallthru
        _
      %p147 = scmp.lt.s32.totalorder %s20, 2
      // Predicated region
      $region17: #{tpu_custom_call.1} parent=5 // pred_check
        %p148 = pneg %p147
      $region18: #{tpu_custom_call.1} parent=5 // pred_check_branch
        %150 = sbr.rel (%p148) target = $region20
      $region19: #{tpu_custom_call.1} parent=5 // pred_region
        // Predicated region
        $region21: #{tpu_custom_call.1} parent=19 // pred_check
          %p151 = pneg %p40
        $region22: #{tpu_custom_call.1} parent=19 // pred_check_branch
          %153 = sbr.rel (%p151) target = $region24
        $region23: #{tpu_custom_call.1} parent=19 // pred_region
          %s154 = sand.u32 %s30, 1
          %s155 = scalar_lea.sflag [#allocation3], %s154
          %s156 = sand.u32 %s30, 1
          %s157 = smul.addr %s156, 8
          %s158 = scalar_lea.vmem [#allocation2], %s157
          %s160 = ssub.s32 128, 128
          %161 = vsyncadd %s155, %s160
          %s162 = smul.addr %s20, 128
          %s163 = scalar_lea.hbm %s0, %s162
          %s165 = sshll.u32 %s158, 4
          %s166 = int_to_ptr.vmem [resolvable:$true] %s165
          %168 = dma.hbm_to_vmem [thread:$0]  %s163, 128, %s166, %s155
        $region24: #{tpu_custom_call.1} parent=19 // pred_fallthru
          _
      $region20: #{tpu_custom_call.1} parent=5 // pred_fallthru
        _
      %p169 = scmp.le.s32.totalorder 1, %s20
      %p170 = scmp.lt.s32.totalorder %s20, 3
      %p171 = pnand %p169, %p170
      %p172 = pneg %p171
      // Predicated region
      $region25: #{tpu_custom_call.1} parent=5 // pred_check
        _
      $region26: #{tpu_custom_call.1} parent=5 // pred_check_branch
        %174 = sbr.rel (%p171) target = $region28
      $region27: #{tpu_custom_call.1} parent=5 // pred_region
        %s175 = ssub.s32 %s20, 1
        %s176 = sand.u32 %s33, 1
        %s177 = scalar_lea.sflag [#allocation3], %s176
        %s178 = sand.u32 %s33, 1
        %s179 = smul.addr %s178, 8
        %s180 = scalar_lea.vmem [#allocation2], %s179
        // Predicated region
        $region29: #{tpu_custom_call.1} parent=27 // pred_check
          %p181 = pneg %p46
        $region30: #{tpu_custom_call.1} parent=27 // pred_check_branch
          %183 = sbr.rel (%p181) target = $region32
        $region31: #{tpu_custom_call.1} parent=27 // pred_region
          %184 = dma.done %s177, 128
        $region32: #{tpu_custom_call.1} parent=27 // pred_fallthru
          _
        // Predicated region
        $region33: #{tpu_custom_call.1} parent=27 // pred_check
          %p185 = pneg %p67
        $region34: #{tpu_custom_call.1} parent=27 // pred_check_branch
          %187 = sbr.rel (%p185) target = $region36
        $region35: #{tpu_custom_call.1} parent=27 // pred_region
          %188 = dma.done [#allocation6], 2048
        $region36: #{tpu_custom_call.1} parent=27 // pred_fallthru
          _
        %s189 = sand.u32 %s33, 1
        %s190 = scalar_lea.sflag [#allocation3], %s189
        %s191 = sand.u32 %s33, 1
        %s192 = smul.addr %s191, 8
        %s193 = scalar_lea.vmem [#allocation2], %s192
        %p194 = pneg %p46
        %p195 = pneg %p43
        %p196 = pneg %p67
        %p197 = pneg %p64
        %p198 = pneg %p93
        %p199 = pneg %p90
        %s200 = sand.u32 %s80, 1
        %s201 = scalar_lea.sflag [#allocation4], %s200
        %s202 = sand.u32 %s80, 1
        %s203 = smul.addr %s202, 8
        %s204 = scalar_lea.vmem [#allocation7], %s203
        %p205 = pneg %p119
        %p206 = pneg %p116
        %s207 = sand.u32 %s106, 1
        %s208 = scalar_lea.sflag [#allocation9], %s207
        %s209 = sand.u32 %s106, 1
        %s210 = smul.addr %s209, 8
        %s211 = scalar_lea.vmem [#allocation8], %s210
        %v212 = vld [vmem:[%s180] sm:$0xff]
        %v213 = vld [vmem:[#allocation5] sm:$0xff]
        %v214 = vld [vmem:[#allocation5 + $0x8] sm:$0xff]
        %v215 = vld [vmem:[#allocation5 + $0x10] sm:$0xff]
        %v216 = vld [vmem:[#allocation5 + $0x18] sm:$0xff]
        %v217 = vld [vmem:[#allocation5 + $0x20] sm:$0xff]
        %v218 = vld [vmem:[#allocation5 + $0x28] sm:$0xff]
        %v219 = vld [vmem:[#allocation5 + $0x30] sm:$0xff]
        %v220 = vld [vmem:[#allocation5 + $0x38] sm:$0xff]
        %v221 = vld [vmem:[#allocation5 + $0x40] sm:$0xff]
        %v222 = vld [vmem:[#allocation5 + $0x48] sm:$0xff]
        %v223 = vld [vmem:[#allocation5 + $0x50] sm:$0xff]
        %v224 = vld [vmem:[#allocation5 + $0x58] sm:$0xff]
        %v225 = vld [vmem:[#allocation5 + $0x60] sm:$0xff]
        %v226 = vld [vmem:[#allocation5 + $0x68] sm:$0xff]
        %v227 = vld [vmem:[#allocation5 + $0x70] sm:$0xff]
        %v228 = vld [vmem:[#allocation5 + $0x78] sm:$0xff]
        %229 = vmatprep.subr.mxu0 0.0
        %230 = vmatpush1.msra.mxu0 %v213
        %231 = vmatprep.subr.mxu0 0.0
        %232 = vmatpush1.msra.mxu0 %v214
        %233 = vmatprep.subr.mxu0 0.0
        %234 = vmatpush1.msra.mxu0 %v215
        %235 = vmatprep.subr.mxu0 0.0
        %236 = vmatpush1.msra.mxu0 %v216
        %237 = vmatprep.subr.mxu0 0.0
        %238 = vmatpush1.msra.mxu0 %v217
        %239 = vmatprep.subr.mxu0 0.0
        %240 = vmatpush1.msra.mxu0 %v218
        %241 = vmatprep.subr.mxu0 0.0
        %242 = vmatpush1.msra.mxu0 %v219
        %243 = vmatprep.subr.mxu0 0.0
        %244 = vmatpush1.msra.mxu0 %v220
        %245 = vmatprep.subr.mxu0 0.0
        %246 = vmatpush1.msra.mxu0 %v221
        %247 = vmatprep.subr.mxu0 0.0
        %248 = vmatpush1.msra.mxu0 %v222
        %249 = vmatprep.subr.mxu0 0.0
        %250 = vmatpush1.msra.mxu0 %v223
        %251 = vmatprep.subr.mxu0 0.0
        %252 = vmatpush1.msra.mxu0 %v224
        %253 = vmatprep.subr.mxu0 0.0
        %254 = vmatpush1.msra.mxu0 %v225
        %255 = vmatprep.subr.mxu0 0.0
        %256 = vmatpush1.msra.mxu0 %v226
        %257 = vmatprep.subr.mxu0 0.0
        %258 = vmatpush1.msra.mxu0 %v227
        %259 = vmatprep.subr.mxu0 0.0
        %260 = vmatpush1.msra.mxu0 %v228
        %261 = vmatprep.subr.mxu0 0.0
        %262 = vmatpush1.msra.mxu0 0.0
        %263 = vmatprep.subr.mxu0 0.0
        %264 = vmatpush1.msra.mxu0 0.0
        %265 = vmatprep.subr.mxu0 0.0
        %266 = vmatpush1.msra.mxu0 0.0
        %267 = vmatprep.subr.mxu0 0.0
        %268 = vmatpush1.msra.mxu0 0.0
        %269 = vmatprep.subr.mxu0 0.0
        %270 = vmatpush1.msra.mxu0 0.0
        %271 = vmatprep.subr.mxu0 0.0
        %272 = vmatpush1.msra.mxu0 0.0
        %273 = vmatprep.subr.mxu0 0.0
        %274 = vmatpush1.msra.mxu0 0.0
        %275 = vmatprep.subr.mxu0 0.0
        %276 = vmatpush1.msra.mxu0 0.0
        %277 = vmatprep.subr.mxu0 0.0
        %278 = vmatpush1.msra.mxu0 0.0
        %279 = vmatprep.subr.mxu0 0.0
        %280 = vmatpush1.msra.mxu0 0.0
        %281 = vmatprep.subr.mxu0 0.0
        %282 = vmatpush1.msra.mxu0 0.0
        %283 = vmatprep.subr.mxu0 0.0
        %284 = vmatpush1.msra.mxu0 0.0
        %285 = vmatprep.subr.mxu0 0.0
        %286 = vmatpush1.msra.mxu0 0.0
        %287 = vmatprep.subr.mxu0 0.0
        %288 = vmatpush1.msra.mxu0 0.0
        %289 = vmatprep.subr.mxu0 0.0
        %290 = vmatpush1.msra.mxu0 0.0
        %291 = vmatprep.subr.mxu0 0.0
        %292 = vmatpush1.msra.mxu0 0.0
        %293 = vmatprep.mubr.f32.mxu0 0.0
        %294 = vmatmul.mubr.f32.gmra.mrb[0].mxu0 %v212
        %v295 = vpop.f32.mrb[0].mxu0
        %v296 = vadd.f32 0.0, %v295
        %v297 = vpop.f32.mrb[0].mxu0
        %298 = vdwg.mxu0
        %299 = vst [vmem:[%s211] sm:$0xff] %v296
        %v300 = vsub.f32 %v212, %v296
        %301 = vst [vmem:[%s204] sm:$0xff] %v300
        %s302 = sand.u32 %s80, 1
        %s303 = scalar_lea.sflag [#allocation4], %s302
        %s304 = sand.u32 %s80, 1
        %s305 = smul.addr %s304, 8
        %s306 = scalar_lea.vmem [#allocation7], %s305
        %s307 = sand.u32 %s106, 1
        %s308 = scalar_lea.sflag [#allocation9], %s307
        %s309 = sand.u32 %s106, 1
        %s310 = smul.addr %s309, 8
        %s311 = scalar_lea.vmem [#allocation8], %s310
        // Predicated region
        $region37: #{tpu_custom_call.1} parent=27 // pred_check
          %p312 = pneg %p90
        $region38: #{tpu_custom_call.1} parent=27 // pred_check_branch
          %314 = sbr.rel (%p312) target = $region40
        $region39: #{tpu_custom_call.1} parent=27 // pred_region
          %s316 = ssub.s32 128, 128
          %317 = vsyncadd %s303, %s316
          %s318 = smul.addr %s25, 128
          %s319 = scalar_lea.hbm %s2, %s318
          %s321 = sshll.u32 %s306, 4
          %s322 = int_to_ptr.vmem [resolvable:$true] %s321
          %324 = dma.vmem_to_hbm [thread:$0]  %s322, 128, %s319, %s303
        $region40: #{tpu_custom_call.1} parent=27 // pred_fallthru
          _
        // Predicated region
        $region41: #{tpu_custom_call.1} parent=27 // pred_check
          %p325 = pneg %p116
        $region42: #{tpu_custom_call.1} parent=27 // pred_check_branch
          %327 = sbr.rel (%p325) target = $region44
        $region43: #{tpu_custom_call.1} parent=27 // pred_region
          %s329 = ssub.s32 128, 128
          %330 = vsyncadd %s308, %s329
          %s331 = smul.addr %s25, 128
          %s332 = scalar_lea.hbm %s3, %s331
          %s334 = sshll.u32 %s311, 4
          %s335 = int_to_ptr.vmem [resolvable:$true] %s334
          %337 = dma.vmem_to_hbm [thread:$0]  %s335, 128, %s332, %s308
        $region44: #{tpu_custom_call.1} parent=27 // pred_fallthru
          _
      $region28: #{tpu_custom_call.1} parent=5 // pred_fallthru
        _
      %p338 = scmp.le.s32.totalorder 2, %s20
      // Predicated region
      $region45: #{tpu_custom_call.1} parent=5 // pred_check
        %p339 = pneg %p338
      $region46: #{tpu_custom_call.1} parent=5 // pred_check_branch
        %341 = sbr.rel (%p339) target = $region48
      $region47: #{tpu_custom_call.1} parent=5 // pred_region
        %s342 = ssub.s32 %s20, 2
        // Predicated region
        $region49: #{tpu_custom_call.1} parent=47 // pred_check
          %p343 = pneg %p96
        $region50: #{tpu_custom_call.1} parent=47 // pred_check_branch
          %345 = sbr.rel (%p343) target = $region52
        $region51: #{tpu_custom_call.1} parent=47 // pred_region
          %s346 = sand.u32 %s81, 1
          %s347 = scalar_lea.sflag [#allocation4], %s346
          %s348 = sand.u32 %s81, 1
          %s349 = smul.addr %s348, 8
          %s350 = scalar_lea.vmem [#allocation7], %s349
          %351 = dma.done %s347, 128
        $region52: #{tpu_custom_call.1} parent=47 // pred_fallthru
          _
        // Predicated region
        $region53: #{tpu_custom_call.1} parent=47 // pred_check
          %p352 = pneg %p122
        $region54: #{tpu_custom_call.1} parent=47 // pred_check_branch
          %354 = sbr.rel (%p352) target = $region56
        $region55: #{tpu_custom_call.1} parent=47 // pred_region
          %s355 = sand.u32 %s107, 1
          %s356 = scalar_lea.sflag [#allocation9], %s355
          %s357 = sand.u32 %s107, 1
          %s358 = smul.addr %s357, 8
          %s359 = scalar_lea.vmem [#allocation8], %s358
          %360 = dma.done %s356, 128
        $region56: #{tpu_custom_call.1} parent=47 // pred_fallthru
          _
      $region48: #{tpu_custom_call.1} parent=5 // pred_fallthru
        _
    $region6: #{tpu_custom_call.1} parent=1 // loop_footer
      %s24 = sadd.s32 1, %s20
    $region7: #{tpu_custom_call.1} parent=1 // loop_footer_branch
      %19 = sbr.rel target = $region3
    $region8: #{tpu_custom_call.1} parent=1 // loop_exit
      _
    %361 = vsyncpa [#allocation3], 1
    %s362 = scalar_lea.sflag [#allocation3], 1
    %363 = vsyncpa %s362, 1
    %364 = vsyncpa [#allocation6], 1
    %365 = vsyncpa [#allocation4], 1
    %s366 = scalar_lea.sflag [#allocation4], 1
    %367 = vsyncpa %s366, 1
    %368 = vsyncpa [#allocation9], 1
    %s369 = scalar_lea.sflag [#allocation9], 1
    %370 = vsyncpa %s369, 1

</llo_original>
